<compile_context>
chip_gen: v5e
topology: v5e:2x2
jax: 0.10.0
libtpu: 0.0.40
codegen_flags: <defaults>
</compile_context>

<pallas_src>
import jax
import jax.numpy as jnp
from jax.experimental import pallas as pl
from jax.experimental.pallas import tpu as pltpu


def _round_up(x, m):
    return ((x + m - 1) // m) * m


def binaps_fwd_kernel(x_ref, wbt_ref, wb_ref, b_ref, o_ref):
    # x_ref   : (TB, F) bf16  binary input tile (values are exactly 0/1)
    # wbt_ref : (F,  H) bf16  binarized weights, pre-transposed (encoder, NN form)
    # wb_ref  : (H,  F) bf16  binarized weights (decoder, NN form)
    # b_ref   : (1,  H) f32   fused bias: b_enc + b_act0
    # o_ref   : (TB, F) f32   binary reconstruction

    # --- encoder: x @ W_B^T  (MXU, bf16 inputs, exact f32 accumulation) ------
    h_pre = jnp.dot(x_ref[...], wbt_ref[...], preferred_element_type=jnp.float32)

    # --- act0 (non-final): fused (b_enc + b_act0), hard step at 0 ------------
    h = ((h_pre + b_ref[...]) > 0.0).astype(jnp.bfloat16)          # (TB, H), 0/1

    # --- decoder: h @ W_B (tied binarized weights, no linear bias) -----------
    y_pre = jnp.dot(h, wb_ref[...], preferred_element_type=jnp.float32)

    # --- act3 (final): bias forced to 0 by Net.clipWeights() -> noBias() -----
    o_ref[...] = (y_pre > 0.0).astype(o_ref.dtype)


def binaps_forward(x, w, b_enc, b_act0, *, batch_tile=256):
    """Fused BinaPS forward.  x: (B, F) 0/1 values; w: (H, F) continuous."""
    B, F = x.shape
    H = w.shape[0]
    assert w.shape == (H, F)

    # ---- one-time (per call) prep in XLA, outside the grid loop -------------
    wb_bf16 = (w > 0.5).astype(jnp.bfloat16)            # (H, F)  decoder layout
    wbt_bf16 = wb_bf16.T                                # (F, H)  encoder layout
    bias = (jnp.reshape(b_enc, (1, H)) + jnp.reshape(b_act0, (1, H))).astype(jnp.float32)
    x_bf16 = x.astype(jnp.bfloat16)                     # 0/1 -> exact in bf16

    # ---- batch tiling (pad ragged batches with zero rows) -------------------
    tb = min(batch_tile, _round_up(B, 8))
    tb = _round_up(tb, 8)
    Bp = _round_up(B, tb)
    if Bp != B:
        x_bf16 = jnp.pad(x_bf16, ((0, Bp - B), (0, 0)))
    grid = (Bp // tb,)

    cost = pl.CostEstimate(
        flops=4 * Bp * H * F,                           # two (Bp,H,F) matmuls
        transcendentals=0,
        bytes_accessed=(Bp * F * 2)                     # x (bf16 in)
        + (Bp * F * 4)                                  # out (f32)
        + (2 * H * F * 2)                               # both W_B layouts (bf16)
        + (H * 4),                                      # fused bias
    )

    out = pl.pallas_call(
        binaps_fwd_kernel,
        out_shape=jax.ShapeDtypeStruct((Bp, F), jnp.float32),
        grid_spec=pltpu.PrefetchScalarGridSpec(
            num_scalar_prefetch=0,
            grid=grid,
            in_specs=[
                pl.BlockSpec((tb, F), lambda i: (i, 0)),   # x: streamed over batch
                pl.BlockSpec((F, H), lambda i: (0, 0)),    # W_B^T: grid-invariant
                pl.BlockSpec((H, F), lambda i: (0, 0)),    # W_B:   grid-invariant
                pl.BlockSpec((1, H), lambda i: (0, 0)),    # fused bias
            ],
            out_specs=pl.BlockSpec((tb, F), lambda i: (i, 0)),
        ),
        compiler_params=pltpu.CompilerParams(
            dimension_semantics=("parallel",),             # megacore-shardable batch axis
            vmem_limit_bytes=64 * 1024 * 1024,
        ),
        cost_estimate=cost,
    )(x_bf16, wbt_bf16, wb_bf16, bias)

    return out[:B] if Bp != B else out


def binaps_forward_ref(x, w, b_enc, b_act0):
    """Pure-JAX reference of the same forward semantics (f32 throughout)."""
    w_b = (w > 0.5).astype(jnp.float32)
    h_pre = x.astype(jnp.float32) @ w_b.T + jnp.reshape(b_enc, (1, -1))
    h = ((h_pre + jnp.reshape(b_act0, (1, -1))) > 0.0).astype(jnp.float32)
    y_pre = h @ w_b
    return (y_pre > 0.0).astype(jnp.float32)


if __name__ == "__main__":
    key = jax.random.PRNGKey(0)
    k_w, k_x = jax.random.split(key)

    B, F, H = 16, 256, 128          # batch, input features, hidden (patterns), H <= F

    # Deterministic synthetic parameters (module __init__ / clipWeights semantics):
    #   init_weights: (H, F) continuous, clipped to [-1, 1]  -> uniform [0, 1] here
    #   init_bias   : (H,) filled with -1
    #   act0 bias   : zeros, clipBias() keeps it <= 0        -> zeros
    #   act3 bias   : noBias() forces zeros                  -> omitted from kernel
    w = jax.random.uniform(k_w, (H, F), dtype=jnp.float32)
    b_enc = -jnp.ones((1, H), dtype=jnp.float32)
    b_act0 = jnp.zeros((1, H), dtype=jnp.float32)

    # Binary input data (sparse-ish, like transactional data in BinaPS)
    x = (jax.random.uniform(k_x, (B, F), dtype=jnp.float32) > 0.8).astype(jnp.float32)

    out = binaps_forward(x, w, b_enc, b_act0)
    out = jax.block_until_ready(out)

    ref = binaps_forward_ref(x, w, b_enc, b_act0)
    assert out.shape == (B, F) and out.dtype == jnp.float32
    # bf16 casts of 0/1 operands + f32 accumulation are bit-exact, so require equality.
    assert bool(jnp.all(out == ref)), "Pallas kernel mismatch vs JAX reference"

    # TODO(synk): exact myla.BinaryActivation train-time flag semantics (False/True arg)
    # were reconstructed from the BinaPS paper; source of my_layers.py was not provided.
    print("KERNEL_OK")
</pallas_src>

<mosaic_0001>
module attributes {stable_mosaic.version = 11 : i64} {
  func.func @binaps_fwd_kernel(%arg0: i32, %arg1: memref<16x256xbf16, #tpu.memory_space<vmem>>, %arg2: memref<256x128xbf16, #tpu.memory_space<vmem>>, %arg3: memref<128x256xbf16, #tpu.memory_space<vmem>>, %arg4: memref<1x128xf32, #tpu.memory_space<vmem>>, %arg5: memref<16x256xf32, #tpu.memory_space<vmem>>) attributes {dimension_semantics = [#tpu.dimension_semantics<parallel>], iteration_bounds = array<i64: 1>, scalar_prefetch = 0 : i64, scratch_operands = 0 : i64, tpu.core_type = #tpu.core_type<tc>, window_params = [{transform_indices = @transform_0, window_bounds = array<i64: 16, 256>}, {pipeline_mode = #tpu.pipeline_mode<synchronous>, transform_indices = @transform_1, window_bounds = array<i64: 256, 128>}, {pipeline_mode = #tpu.pipeline_mode<synchronous>, transform_indices = @transform_2, window_bounds = array<i64: 128, 256>}, {pipeline_mode = #tpu.pipeline_mode<synchronous>, transform_indices = @transform_3, window_bounds = array<i64: 1, 128>}, {transform_indices = @transform_4, window_bounds = array<i64: 16, 256>}]} {
    %c0 = arith.constant 0 : index
    %c0_0 = arith.constant 0 : index
    %0 = vector.load %arg1[%c0, %c0_0] : memref<16x256xbf16, #tpu.memory_space<vmem>>, vector<16x256xbf16>
    %c0_1 = arith.constant 0 : index
    %c0_2 = arith.constant 0 : index
    %1 = vector.load %arg2[%c0_1, %c0_2] : memref<256x128xbf16, #tpu.memory_space<vmem>>, vector<256x128xbf16>
    %cst = arith.constant dense<0.000000e+00> : vector<16x128xf32>
    %2 = tpu.matmul %0, %1, %cst {dimension_numbers = #tpu.dot_dimension_numbers<[1], [0], [0], [1], [0, 0, 1, 1], [], []>} : vector<16x256xbf16>, vector<256x128xbf16>, vector<16x128xf32> -> vector<16x128xf32>
    %c0_3 = arith.constant 0 : index
    %c0_4 = arith.constant 0 : index
    %3 = vector.load %arg4[%c0_3, %c0_4] : memref<1x128xf32, #tpu.memory_space<vmem>>, vector<1x128xf32>
    %4 = vector.broadcast %3 : vector<1x128xf32> to vector<16x128xf32>
    %5 = arith.addf %2, %4 : vector<16x128xf32>
    %cst_5 = arith.constant 0.000000e+00 : f32
    %6 = vector.broadcast %cst_5 : f32 to vector<16x128xf32>
    %7 = arith.cmpf ogt, %5, %6 : vector<16x128xf32>
    %8 = arith.extui %7 : vector<16x128xi1> to vector<16x128xi32>
    %9 = arith.sitofp %8 : vector<16x128xi32> to vector<16x128xf32>
    %10 = arith.truncf %9 : vector<16x128xf32> to vector<16x128xbf16>
    %c0_6 = arith.constant 0 : index
    %c0_7 = arith.constant 0 : index
    %11 = vector.load %arg3[%c0_6, %c0_7] : memref<128x256xbf16, #tpu.memory_space<vmem>>, vector<128x256xbf16>
    %cst_8 = arith.constant dense<0.000000e+00> : vector<16x256xf32>
    %12 = tpu.matmul %10, %11, %cst_8 {dimension_numbers = #tpu.dot_dimension_numbers<[1], [0], [0], [1], [0, 0, 1, 1], [], []>} : vector<16x128xbf16>, vector<128x256xbf16>, vector<16x256xf32> -> vector<16x256xf32>
    %cst_9 = arith.constant 0.000000e+00 : f32
    %13 = vector.broadcast %cst_9 : f32 to vector<16x256xf32>
    %14 = arith.cmpf ogt, %12, %13 : vector<16x256xf32>
    %15 = arith.extui %14 : vector<16x256xi1> to vector<16x256xi32>
    %16 = arith.sitofp %15 : vector<16x256xi32> to vector<16x256xf32>
    %c0_10 = arith.constant 0 : index
    %c0_11 = arith.constant 0 : index
    %17 = vector.load %arg5[%c0_10, %c0_11] : memref<16x256xf32, #tpu.memory_space<vmem>>, vector<16x256xf32>
    tpu.vector_store %arg5[%c0_10, %c0_11], %16 {strides = array<i32>} : memref<16x256xf32, #tpu.memory_space<vmem>>, vector<16x256xf32>,
    return
  }
  func.func @transform_0(%arg0: i32) -> (i32, i32) {
    %c0_i32 = arith.constant 0 : i32
    %c0_i32_0 = arith.constant 0 : i32
    return %arg0, %c0_i32 : i32, i32
  }
  func.func @transform_1(%arg0: i32) -> (i32, i32) {
    %c0_i32 = arith.constant 0 : i32
    %c0_i32_0 = arith.constant 0 : i32
    %c0_i32_1 = arith.constant 0 : i32
    return %c0_i32, %c0_i32_0 : i32, i32
  }
  func.func @transform_2(%arg0: i32) -> (i32, i32) {
    %c0_i32 = arith.constant 0 : i32
    %c0_i32_0 = arith.constant 0 : i32
    %c0_i32_1 = arith.constant 0 : i32
    return %c0_i32, %c0_i32_0 : i32, i32
  }
  func.func @transform_3(%arg0: i32) -> (i32, i32) {
    %c0_i32 = arith.constant 0 : i32
    %c0_i32_0 = arith.constant 0 : i32
    %c0_i32_1 = arith.constant 0 : i32
    return %c0_i32, %c0_i32_0 : i32, i32
  }
  func.func @transform_4(%arg0: i32) -> (i32, i32) {
    %c0_i32 = arith.constant 0 : i32
    %c0_i32_0 = arith.constant 0 : i32
    return %arg0, %c0_i32 : i32, i32
  }
}

</mosaic_0001>

<llo_original>
// kernel: tpu_custom_call.1
$region0: #{tpu_custom_call.1}
  #allocation0 [shape = 'u32[]', space=smem, size = 0x4, offset = 0x4, fixed_abs, tag = 'smem constant byte address 0x4 - core index']
  #allocation1 [shape = 'u32[72,128]{1,0:T(1,128)}', space=vmem, size = 0x9000, scoped, tag = 'internal scratch']
  %s0 = inlined_call_operand.hbm [shape: bf16[16,256], index: 0, kind: input, shape index: {}]
  %s1 = inlined_call_operand.hbm [shape: bf16[256,128], index: 1, kind: input, shape index: {}]
  %s2 = inlined_call_operand.hbm [shape: bf16[128,256], index: 2, kind: input, shape index: {}]
  %s3 = inlined_call_operand.vmem [shape: f32[1,128], index: 3, kind: input, shape index: {}]
  %s4 = inlined_call_operand.hbm [shape: f32[16,256], index: 4, kind: output, shape index: {}]
  %s5 = sld [smem:[#allocation0]]
  $region38: #{tpu_custom_call.1} parent=0
    _
  %s7 = ssub.s32 1, %s5
  %s8 = scalar_select 0, %s7, %s5
  $region1: #{tpu_custom_call.1} parent=0
    #allocation2 [shape = 'u8[8192]{0}', space=vmem, size = 0x2000, scoped, tag = 'input window, operand 0, single buffered']
    #allocation3 [shape = 's32[1]{0}', space=sflag, size = 0x4, scoped, tag = 'scoped memory for tpu_custom_call.1']
    #allocation4 [shape = 's32[1]{0}', space=sflag, size = 0x4, scoped, tag = 'scoped memory for tpu_custom_call.1']
    #allocation5 [shape = 'u8[65536]{0}', space=vmem, size = 0x10000, scoped, tag = 'input window, operand 1, single buffered']
    #allocation6 [shape = 's32[1]{0}', space=sflag, size = 0x4, scoped, tag = 'scoped memory for tpu_custom_call.1']
    #allocation7 [shape = 'u8[65536]{0}', space=vmem, size = 0x10000, scoped, tag = 'input window, operand 2, single buffered']
    #allocation8 [shape = 'u8[16384]{0}', space=vmem, size = 0x4000, scoped, tag = 'output window, operand 0, single buffered']
    %9 = vsyncpa [#allocation3], 0
    %10 = vsyncpa [#allocation6], 0
    %11 = vsyncpa [#allocation4], 0
    // Predicated region
    $region2: #{tpu_custom_call.1} parent=1 // pred_check
      _
    $region3: #{tpu_custom_call.1} parent=1 // pred_check_branch
      %13 = sbr.rel (0) target = $region5
    $region4: #{tpu_custom_call.1} parent=1 // pred_region
      %15 = vsyncadd [#allocation3], 0
      %s16 = sshll.u32 %s0, 4
      %s17 = int_to_ptr.hbm [resolvable:$true] %s16
      %s18 = sshll.u32 [#allocation2], 4
      %s19 = int_to_ptr.vmem [resolvable:$true] %s18
      %24 = dma.hbm_to_vmem [thread:$0]  %s17, 256, %s19, [#allocation3], 128, 128, 8
    $region5: #{tpu_custom_call.1} parent=1 // pred_fallthru
      _
    // Predicated region
    $region6: #{tpu_custom_call.1} parent=1 // pred_check
      _
    $region7: #{tpu_custom_call.1} parent=1 // pred_check_branch
      %26 = sbr.rel (0) target = $region9
    $region8: #{tpu_custom_call.1} parent=1 // pred_region
      %28 = vsyncadd [#allocation6], 0
      %s29 = sshll.u32 %s1, 4
      %s30 = int_to_ptr.hbm [resolvable:$true] %s29
      %s31 = sshll.u32 [#allocation5], 4
      %s32 = int_to_ptr.vmem [resolvable:$true] %s31
      %37 = dma.hbm_to_vmem [thread:$0]  %s30, 2048, %s32, [#allocation6], 64, 64, 4
    $region9: #{tpu_custom_call.1} parent=1 // pred_fallthru
      _
    // Predicated region
    $region10: #{tpu_custom_call.1} parent=1 // pred_check
      _
    $region11: #{tpu_custom_call.1} parent=1 // pred_check_branch
      %39 = sbr.rel (0) target = $region13
    $region12: #{tpu_custom_call.1} parent=1 // pred_region
      %41 = vsyncadd [#allocation6], 0
      %s42 = sshll.u32 %s2, 4
      %s43 = int_to_ptr.hbm [resolvable:$true] %s42
      %s44 = sshll.u32 [#allocation7], 4
      %s45 = int_to_ptr.vmem [resolvable:$true] %s44
      %50 = dma.hbm_to_vmem [thread:$0]  %s43, 2048, %s45, [#allocation6], 128, 128, 8
    $region13: #{tpu_custom_call.1} parent=1 // pred_fallthru
      _
    // Predicated region
    $region14: #{tpu_custom_call.1} parent=1 // pred_check
      _
    $region15: #{tpu_custom_call.1} parent=1 // pred_check_branch
      %52 = sbr.rel (0) target = $region17
    $region16: #{tpu_custom_call.1} parent=1 // pred_region
      _
    $region17: #{tpu_custom_call.1} parent=1 // pred_fallthru
      _
    // Predicated region
    $region18: #{tpu_custom_call.1} parent=1 // pred_check
      _
    $region19: #{tpu_custom_call.1} parent=1 // pred_check_branch
      %54 = sbr.rel (0) target = $region21
    $region20: #{tpu_custom_call.1} parent=1 // pred_region
      %56 = dma.done [#allocation3], 256
    $region21: #{tpu_custom_call.1} parent=1 // pred_fallthru
      _
    // Predicated region
    $region22: #{tpu_custom_call.1} parent=1 // pred_check
      _
    $region23: #{tpu_custom_call.1} parent=1 // pred_check_branch
      %58 = sbr.rel (0) target = $region25
    $region24: #{tpu_custom_call.1} parent=1 // pred_region
      %60 = dma.done [#allocation6], 2048
    $region25: #{tpu_custom_call.1} parent=1 // pred_fallthru
      _
    // Predicated region
    $region26: #{tpu_custom_call.1} parent=1 // pred_check
      _
    $region27: #{tpu_custom_call.1} parent=1 // pred_check_branch
      %62 = sbr.rel (0) target = $region29
    $region28: #{tpu_custom_call.1} parent=1 // pred_region
      %64 = dma.done [#allocation6], 2048
    $region29: #{tpu_custom_call.1} parent=1 // pred_fallthru
      _
    %v65 = vld [vmem:[#allocation2] sm:$0xff]
    %v66 = vld [vmem:[#allocation2 + $0x8] sm:$0xff]
    %v67 = vld [vmem:[#allocation5] sm:$0xf]
    %v68 = vld [vmem:[#allocation5 + $0x4] sm:$0xf]
    %v69 = vld [vmem:[#allocation5 + $0x8] sm:$0xf]
    %v70 = vld [vmem:[#allocation5 + $0xc] sm:$0xf]
    %v71 = vld [vmem:[#allocation5 + $0x10] sm:$0xf]
    %v72 = vld [vmem:[#allocation5 + $0x14] sm:$0xf]
    %v73 = vld [vmem:[#allocation5 + $0x18] sm:$0xf]
    %v74 = vld [vmem:[#allocation5 + $0x1c] sm:$0xf]
    %v75 = vld [vmem:[#allocation5 + $0x20] sm:$0xf]
    %v76 = vld [vmem:[#allocation5 + $0x24] sm:$0xf]
    %v77 = vld [vmem:[#allocation5 + $0x28] sm:$0xf]
    %v78 = vld [vmem:[#allocation5 + $0x2c] sm:$0xf]
    %v79 = vld [vmem:[#allocation5 + $0x30] sm:$0xf]
    %v80 = vld [vmem:[#allocation5 + $0x34] sm:$0xf]
    %v81 = vld [vmem:[#allocation5 + $0x38] sm:$0xf]
    %v82 = vld [vmem:[#allocation5 + $0x3c] sm:$0xf]
    %v83 = vld [vmem:[#allocation5 + $0x40] sm:$0xf]
    %v84 = vld [vmem:[#allocation5 + $0x44] sm:$0xf]
    %v85 = vld [vmem:[#allocation5 + $0x48] sm:$0xf]
    %v86 = vld [vmem:[#allocation5 + $0x4c] sm:$0xf]
    %v87 = vld [vmem:[#allocation5 + $0x50] sm:$0xf]
    %v88 = vld [vmem:[#allocation5 + $0x54] sm:$0xf]
    %v89 = vld [vmem:[#allocation5 + $0x58] sm:$0xf]
    %v90 = vld [vmem:[#allocation5 + $0x5c] sm:$0xf]
    %v91 = vld [vmem:[#allocation5 + $0x60] sm:$0xf]
    %v92 = vld [vmem:[#allocation5 + $0x64] sm:$0xf]
    %v93 = vld [vmem:[#allocation5 + $0x68] sm:$0xf]
    %v94 = vld [vmem:[#allocation5 + $0x6c] sm:$0xf]
    %v95 = vld [vmem:[#allocation5 + $0x70] sm:$0xf]
    %v96 = vld [vmem:[#allocation5 + $0x74] sm:$0xf]
    %v97 = vld [vmem:[#allocation5 + $0x78] sm:$0xf]
    %v98 = vld [vmem:[#allocation5 + $0x7c] sm:$0xf]
    %v99 = vld [vmem:[%s3] sm:$0x1]
    %v101 = vperm.slane %v99, 0
    %v105 = vunpack.c.l.b16 %v65
    %v106 = vunpack.c.h.b16 %v65
    %v107 = vunpack.c.l.b16 %v66
    %v108 = vunpack.c.h.b16 %v66
    %v109 = vpack.c.b16 %v107, %v105
    %v110 = vpack.c.b16 %v108, %v106
    %v145 = vunpack.c.l.b16 %v67
    %v146 = vunpack.c.l.b16 %v68
    %v147 = vunpack.c.l.b16 %v69
    %v148 = vunpack.c.l.b16 %v70
    %v149 = vunpack.c.l.b16 %v71
    %v150 = vunpack.c.l.b16 %v72
    %v151 = vunpack.c.l.b16 %v73
    %v152 = vunpack.c.l.b16 %v74
    %v153 = vunpack.c.l.b16 %v75
    %v154 = vunpack.c.l.b16 %v76
    %v155 = vunpack.c.l.b16 %v77
    %v156 = vunpack.c.l.b16 %v78
    %v157 = vunpack.c.l.b16 %v79
    %v158 = vunpack.c.l.b16 %v80
    %v159 = vunpack.c.l.b16 %v81
    %v160 = vunpack.c.l.b16 %v82
    %v161 = vunpack.c.l.b16 %v83
    %v162 = vunpack.c.l.b16 %v84
    %v163 = vunpack.c.l.b16 %v85
    %v164 = vunpack.c.l.b16 %v86
    %v165 = vunpack.c.l.b16 %v87
    %v166 = vunpack.c.l.b16 %v88
    %v167 = vunpack.c.l.b16 %v89
    %v168 = vunpack.c.l.b16 %v90
    %v169 = vunpack.c.l.b16 %v91
    %v170 = vunpack.c.l.b16 %v92
    %v171 = vunpack.c.l.b16 %v93
    %v172 = vunpack.c.l.b16 %v94
    %v173 = vunpack.c.l.b16 %v95
    %v174 = vunpack.c.l.b16 %v96
    %v175 = vunpack.c.l.b16 %v97
    %v176 = vunpack.c.l.b16 %v98
    %v177 = vpack.c.b16 %v146, %v145
    %v178 = vpack.c.b16 %v148, %v147
    %v179 = vpack.c.b16 %v150, %v149
    %v180 = vpack.c.b16 %v152, %v151
    %v181 = vpack.c.b16 %v154, %v153
    %v182 = vpack.c.b16 %v156, %v155
    %v183 = vpack.c.b16 %v158, %v157
    %v184 = vpack.c.b16 %v160, %v159
    %v185 = vpack.c.b16 %v162, %v161
    %v186 = vpack.c.b16 %v164, %v163
    %v187 = vpack.c.b16 %v166, %v165
    %v188 = vpack.c.b16 %v168, %v167
    %v189 = vpack.c.b16 %v170, %v169
    %v190 = vpack.c.b16 %v172, %v171
    %v191 = vpack.c.b16 %v174, %v173
    %v192 = vpack.c.b16 %v176, %v175
    %209 = vmatpush.bf16.msra.mxu0 %v184
    %210 = vmatpush.bf16.msra.mxu0 %v183
    %211 = vmatpush.bf16.msra.mxu0 %v182
    %212 = vmatpush.bf16.msra.mxu0 %v181
    %213 = vmatpush.bf16.msra.mxu0 %v180
    %214 = vmatpush.bf16.msra.mxu0 %v179
    %215 = vmatpush.bf16.msra.mxu0 %v178
    %216 = vmatpush.bf16.msra.mxu0 %v177
    %217 = vmatmul.bf16.gmra.mxu0 %v109
    %v218 = vpop.f32.mrf.mxu0
    %v219 = vadd.f32 %v101, %v218
    %v220 = vpop.f32.mrf.mxu0
    %v221 = vadd.f32 %v101, %v220
    %222 = vdwg.mxu0
    %223 = vmatpush.bf16.msra.mxu0 %v192
    %224 = vmatpush.bf16.msra.mxu0 %v191
    %225 = vmatpush.bf16.msra.mxu0 %v190
    %226 = vmatpush.bf16.msra.mxu0 %v189
    %227 = vmatpush.bf16.msra.mxu0 %v188
    %228 = vmatpush.bf16.msra.mxu0 %v187
    %229 = vmatpush.bf16.msra.mxu0 %v186
    %230 = vmatpush.bf16.msra.mxu0 %v185
    %231 = vmatmul.bf16.gmra.mxu0 %v110
    %v232 = vpop.f32.mrf.mxu0
    %v233 = vadd.f32 %v219, %v232
    %v234 = vpop.f32.mrf.mxu0
    %v235 = vadd.f32 %v221, %v234
    %236 = vdwg.mxu0
    %vm237 = vcmp.gt.f32.partialorder %v233, 0.0
    %vm238 = vcmp.gt.f32.partialorder %v235, 0.0
    %v239 = vsel %vm237, 1, 0
    %v240 = vsel %vm238, 1, 0
    %v241 = vcvt.s32.f32 %v239
    %v242 = vcvt.s32.f32 %v240
    %v243 = vpack.c.bf16 %v242, %v241
    %v244 = vld [vmem:[#allocation7] sm:$0xff]
    %v245 = vld [vmem:[#allocation7 + $0x8] sm:$0xff]
    %v246 = vld [vmem:[#allocation7 + $0x10] sm:$0xff]
    %v247 = vld [vmem:[#allocation7 + $0x18] sm:$0xff]
    %v248 = vld [vmem:[#allocation7 + $0x20] sm:$0xff]
    %v249 = vld [vmem:[#allocation7 + $0x28] sm:$0xff]
    %v250 = vld [vmem:[#allocation7 + $0x30] sm:$0xff]
    %v251 = vld [vmem:[#allocation7 + $0x38] sm:$0xff]
    %v252 = vld [vmem:[#allocation7 + $0x40] sm:$0xff]
    %v253 = vld [vmem:[#allocation7 + $0x48] sm:$0xff]
    %v254 = vld [vmem:[#allocation7 + $0x50] sm:$0xff]
    %v255 = vld [vmem:[#allocation7 + $0x58] sm:$0xff]
    %v256 = vld [vmem:[#allocation7 + $0x60] sm:$0xff]
    %v257 = vld [vmem:[#allocation7 + $0x68] sm:$0xff]
    %v258 = vld [vmem:[#allocation7 + $0x70] sm:$0xff]
    %v259 = vld [vmem:[#allocation7 + $0x78] sm:$0xff]
    %v276 = vunpack.c.l.b16 %v244
    %v277 = vunpack.c.h.b16 %v244
    %v278 = vunpack.c.l.b16 %v245
    %v279 = vunpack.c.h.b16 %v245
    %v280 = vunpack.c.l.b16 %v246
    %v281 = vunpack.c.h.b16 %v246
    %v282 = vunpack.c.l.b16 %v247
    %v283 = vunpack.c.h.b16 %v247
    %v284 = vunpack.c.l.b16 %v248
    %v285 = vunpack.c.h.b16 %v248
    %v286 = vunpack.c.l.b16 %v249
    %v287 = vunpack.c.h.b16 %v249
    %v288 = vunpack.c.l.b16 %v250
    %v289 = vunpack.c.h.b16 %v250
    %v290 = vunpack.c.l.b16 %v251
    %v291 = vunpack.c.h.b16 %v251
    %v292 = vunpack.c.l.b16 %v252
    %v293 = vunpack.c.h.b16 %v252
    %v294 = vunpack.c.l.b16 %v253
    %v295 = vunpack.c.h.b16 %v253
    %v296 = vunpack.c.l.b16 %v254
    %v297 = vunpack.c.h.b16 %v254
    %v298 = vunpack.c.l.b16 %v255
    %v299 = vunpack.c.h.b16 %v255
    %v300 = vunpack.c.l.b16 %v256
    %v301 = vunpack.c.h.b16 %v256
    %v302 = vunpack.c.l.b16 %v257
    %v303 = vunpack.c.h.b16 %v257
    %v304 = vunpack.c.l.b16 %v258
    %v305 = vunpack.c.h.b16 %v258
    %v306 = vunpack.c.l.b16 %v259
    %v307 = vunpack.c.h.b16 %v259
    %v308 = vpack.c.b16 %v278, %v276
    %v309 = vpack.c.b16 %v279, %v277
    %v310 = vpack.c.b16 %v282, %v280
    %v311 = vpack.c.b16 %v283, %v281
    %v312 = vpack.c.b16 %v286, %v284
    %v313 = vpack.c.b16 %v287, %v285
    %v314 = vpack.c.b16 %v290, %v288
    %v315 = vpack.c.b16 %v291, %v289
    %v316 = vpack.c.b16 %v294, %v292
    %v317 = vpack.c.b16 %v295, %v293
    %v318 = vpack.c.b16 %v298, %v296
    %v319 = vpack.c.b16 %v299, %v297
    %v320 = vpack.c.b16 %v302, %v300
    %v321 = vpack.c.b16 %v303, %v301
    %v322 = vpack.c.b16 %v306, %v304
    %v323 = vpack.c.b16 %v307, %v305
    %340 = vmatpush.bf16.msra.mxu0 %v322
    %341 = vmatpush.bf16.msra.mxu0 %v320
    %342 = vmatpush.bf16.msra.mxu0 %v318
    %343 = vmatpush.bf16.msra.mxu0 %v316
    %344 = vmatpush.bf16.msra.mxu0 %v314
    %345 = vmatpush.bf16.msra.mxu0 %v312
    %346 = vmatpush.bf16.msra.mxu0 %v310
    %347 = vmatpush.bf16.msra.mxu0 %v308
    %348 = vmatmul.bf16.gmra.mxu0 %v243
    %v349 = vpop.f32.mrf.mxu0
    %v350 = vadd.f32 0.0, %v349
    %v351 = vpop.f32.mrf.mxu0
    %v352 = vadd.f32 0.0, %v351
    %353 = vdwg.mxu0
    %354 = vmatpush.bf16.msra.mxu0 %v323
    %355 = vmatpush.bf16.msra.mxu0 %v321
    %356 = vmatpush.bf16.msra.mxu0 %v319
    %357 = vmatpush.bf16.msra.mxu0 %v317
    %358 = vmatpush.bf16.msra.mxu0 %v315
    %359 = vmatpush.bf16.msra.mxu0 %v313
    %360 = vmatpush.bf16.msra.mxu0 %v311
    %361 = vmatpush.bf16.msra.mxu0 %v309
    %362 = vmatmul.bf16.gmra.mxu0 %v243
    %v363 = vpop.f32.mrf.mxu0
    %v364 = vadd.f32 0.0, %v363
    %v365 = vpop.f32.mrf.mxu0
    %v366 = vadd.f32 0.0, %v365
    %367 = vdwg.mxu0
    %vm368 = vcmp.gt.f32.partialorder %v350, 0.0
    %vm369 = vcmp.gt.f32.partialorder %v364, 0.0
    %vm370 = vcmp.gt.f32.partialorder %v352, 0.0
    %vm371 = vcmp.gt.f32.partialorder %v366, 0.0
    %v372 = vsel %vm368, 1, 0
    %v373 = vsel %vm369, 1, 0
    %v374 = vsel %vm370, 1, 0
    %v375 = vsel %vm371, 1, 0
    %v376 = vcvt.s32.f32 %v372
    %v377 = vcvt.s32.f32 %v373
    %v378 = vcvt.s32.f32 %v374
    %v379 = vcvt.s32.f32 %v375
    %380 = vst [vmem:[#allocation8] sm:$0xff] %v376
    %381 = vst [vmem:[#allocation8 + $0x8] sm:$0xff] %v377
    %382 = vst [vmem:[#allocation8 + $0x10] sm:$0xff] %v378
    %383 = vst [vmem:[#allocation8 + $0x18] sm:$0xff] %v379
    // Predicated region
    $region30: #{tpu_custom_call.1} parent=1 // pred_check
      _
    $region31: #{tpu_custom_call.1} parent=1 // pred_check_branch
      %385 = sbr.rel (0) target = $region33
    $region32: #{tpu_custom_call.1} parent=1 // pred_region
      %387 = vsyncadd [#allocation4], 0
      %s388 = sshll.u32 [#allocation8], 4
      %s389 = int_to_ptr.vmem [resolvable:$true] %s388
      %s390 = sshll.u32 %s4, 4
      %s391 = int_to_ptr.hbm [resolvable:$true] %s390
      %396 = dma.vmem_to_hbm [thread:$0]  %s389, 512, %s391, [#allocation4], 256, 256, 16
    $region33: #{tpu_custom_call.1} parent=1 // pred_fallthru
      _
    // Predicated region
    $region34: #{tpu_custom_call.1} parent=1 // pred_check
      _
    $region35: #{tpu_custom_call.1} parent=1 // pred_check_branch
      %398 = sbr.rel (0) target = $region37
    $region36: #{tpu_custom_call.1} parent=1 // pred_region
      %400 = dma.done [#allocation4], 512
    $region37: #{tpu_custom_call.1} parent=1 // pred_fallthru
      _
    %401 = vsyncpa [#allocation3], 1
    %402 = vsyncpa [#allocation6], 1
    %403 = vsyncpa [#allocation4], 1

</llo_original>
